<compile_context>
chip_gen: v7x
topology: tpu7x:2x2x1
jax: 0.10.0
libtpu: 0.0.40
codegen_flags: <defaults>
</compile_context>

<pallas_src>
import functools

import jax
import jax.numpy as jnp
from jax.experimental import pallas as pl
from jax.experimental.pallas import tpu as pltpu


def _round_up(a, b):
    return (a + b - 1) // b * b


def _gcn_spmm_kernel(adj_ref, xw_ref, o_ref, acc_ref):
    # adj_ref: (tm, tk)    streamed adjacency tile (bf16)
    # xw_ref:  (tk, d_pad) tile of the precomputed x @ W (bf16)
    # o_ref:   (tm, d_pad) output row tile (f32), lane-dense (d_pad % 128 == 0)
    # acc_ref: (tm, d_pad) f32 accumulator scratch, persists across k steps
    k = pl.program_id(1)

    @pl.when(k == 0)
    def _():
        acc_ref[...] = jnp.zeros_like(acc_ref)

    acc_ref[...] += jnp.dot(
        adj_ref[...], xw_ref[...], preferred_element_type=jnp.float32
    )

    @pl.when(k == pl.num_programs(1) - 1)
    def _():
        o_ref[...] = jnp.maximum(acc_ref[...], 0.0).astype(o_ref.dtype)


@functools.partial(jax.jit, static_argnames=("tm", "tk", "stream_dtype"))
def graph_conv_sparse(x, weight, adj, *, tm=256, tk=512,
                      stream_dtype=jnp.bfloat16):
    N, d_in = x.shape
    d_out = weight.shape[1]
    assert adj.shape == (N, N)
    assert tm % 16 == 0 and tk % 128 == 0

    # --- Hoisted: compute xw = x @ W once (plain XLA dot, MXU). ---
    xw = jnp.dot(x, weight, preferred_element_type=jnp.float32)

    # Lane-dense output: pad channels up to a multiple of 128.
    d_pad = _round_up(max(d_out, 1), 128)

    # Clamp tiles for small graphs, then pad N so the tiles divide evenly.
    tm_eff = min(tm, _round_up(N, 16))
    tk_eff = min(tk, _round_up(N, 128))
    n_rows = _round_up(N, tm_eff)
    n_cols = _round_up(N, tk_eff)

    # Streamed operands in bf16 (zero padding stays zero -> no semantic change).
    adj_p = jnp.pad(adj, ((0, n_rows - N), (0, n_cols - N))).astype(stream_dtype)
    xw_p = jnp.pad(xw, ((0, n_cols - N), (0, d_pad - d_out))).astype(stream_dtype)

    itemsize = jnp.dtype(stream_dtype).itemsize
    vmem_bytes = (
        2 * tm_eff * tk_eff * itemsize      # adj tile, double buffered
        + 2 * tk_eff * d_pad * itemsize     # xw tile, double buffered
        + 2 * tm_eff * d_pad * 4            # output tile, double buffered
        + tm_eff * d_pad * 4                # f32 accumulator scratch
    )
    vmem_limit = int(min(max(2 * vmem_bytes + (4 << 20), 8 << 20), 48 << 20))

    out_padded = pl.pallas_call(
        _gcn_spmm_kernel,
        out_shape=jax.ShapeDtypeStruct((n_rows, d_pad), jnp.float32),
        grid_spec=pltpu.PrefetchScalarGridSpec(
            num_scalar_prefetch=0,
            grid=(n_rows // tm_eff, n_cols // tk_eff),
            in_specs=[
                pl.BlockSpec((tm_eff, tk_eff), lambda i, k: (i, k)),  # adj tile
                pl.BlockSpec((tk_eff, d_pad), lambda i, k: (k, 0)),   # xw tile
            ],
            out_specs=pl.BlockSpec((tm_eff, d_pad), lambda i, k: (i, 0)),
            scratch_shapes=[pltpu.VMEM((tm_eff, d_pad), jnp.float32)],
        ),
        compiler_params=pltpu.CompilerParams(
            dimension_semantics=("parallel", "arbitrary"),
            vmem_limit_bytes=vmem_limit,
        ),
    )(adj_p, xw_p)

    return out_padded[:N, :d_out]


def glorot_init(key, input_dim, output_dim):
    std = jnp.sqrt(2.0 / (input_dim + output_dim))
    return std * jax.random.normal(key, (input_dim, output_dim), jnp.float32)


if __name__ == "__main__":
    # Small synthetic graph: N nodes, input_dim features, output_dim channels.
    N, input_dim, output_dim = 256, 64, 32

    key = jax.random.PRNGKey(0)
    k_x, k_w, k_a = jax.random.split(key, 3)

    x = jax.random.normal(k_x, (N, input_dim), jnp.float32)
    weight = glorot_init(k_w, input_dim, output_dim)

    # Deterministic symmetric normalized adjacency (dense representation).
    a = (jax.random.uniform(k_a, (N, N)) < 0.05).astype(jnp.float32)
    a = jnp.maximum(a, a.T) + jnp.eye(N, dtype=jnp.float32)   # A + I, symmetric
    deg = jnp.sum(a, axis=1)
    d_inv_sqrt = 1.0 / jnp.sqrt(deg)
    adj = a * d_inv_sqrt[:, None] * d_inv_sqrt[None, :]

    # Small tiles here so the demo exercises both grid axes (4 x 2 grid) and
    # the k-accumulation / pl.when init-finalize paths.
    out = graph_conv_sparse(x, weight, adj, tm=64, tk=128)
    jax.block_until_ready(out)

    # Reference check against plain f32 JAX (same math as the PyTorch forward).
    # Slightly loose tolerance because adj / xw are streamed in bf16.
    ref = jnp.maximum(adj @ (x @ weight), 0.0)
    assert out.shape == (N, output_dim)
    assert jnp.allclose(out, ref, atol=3e-2, rtol=3e-2), float(
        jnp.max(jnp.abs(out - ref))
    )

    print("KERNEL_OK")
</pallas_src>

<mosaic_0001>
module attributes {stable_mosaic.version = 11 : i64} {
  func.func @_gcn_spmm_kernel(%arg0: i32, %arg1: i32, %arg2: memref<64x128xbf16, #tpu.memory_space<vmem>>, %arg3: memref<128x128xbf16, #tpu.memory_space<vmem>>, %arg4: memref<64x128xf32, #tpu.memory_space<vmem>>, %arg5: memref<64x128xf32, #tpu.memory_space<vmem>>) attributes {dimension_semantics = [#tpu.dimension_semantics<parallel>, #tpu.dimension_semantics<arbitrary>], iteration_bounds = array<i64: 4, 2>, scalar_prefetch = 0 : i64, scratch_operands = 1 : i64, tpu.core_type = #tpu.core_type<tc>, window_params = [{transform_indices = @transform_0, window_bounds = array<i64: 64, 128>}, {transform_indices = @transform_1, window_bounds = array<i64: 128, 128>}, {transform_indices = @transform_2, window_bounds = array<i64: 64, 128>}]} {
    %c0_i32 = arith.constant 0 : i32
    %0 = arith.cmpi eq, %arg1, %c0_i32 : i32
    %1 = arith.extui %0 : i1 to i32
    %c0_i32_0 = arith.constant 0 : i32
    %2 = arith.cmpi ne, %1, %c0_i32_0 : i32
    scf.if %2 {
      %cst_9 = arith.constant 0.000000e+00 : f32
      %12 = vector.broadcast %cst_9 : f32 to vector<64x128xf32>
      %c0_10 = arith.constant 0 : index
      %c0_11 = arith.constant 0 : index
      %13 = vector.load %arg5[%c0_10, %c0_11] : memref<64x128xf32, #tpu.memory_space<vmem>>, vector<64x128xf32>
      tpu.vector_store %arg5[%c0_10, %c0_11], %12 {strides = array<i32>} : memref<64x128xf32, #tpu.memory_space<vmem>>, vector<64x128xf32>,
    } else {
    }
    %c0 = arith.constant 0 : index
    %c0_1 = arith.constant 0 : index
    %3 = vector.load %arg5[%c0, %c0_1] : memref<64x128xf32, #tpu.memory_space<vmem>>, vector<64x128xf32>
    %c0_2 = arith.constant 0 : index
    %c0_3 = arith.constant 0 : index
    %4 = vector.load %arg2[%c0_2, %c0_3] : memref<64x128xbf16, #tpu.memory_space<vmem>>, vector<64x128xbf16>
    %c0_4 = arith.constant 0 : index
    %c0_5 = arith.constant 0 : index
    %5 = vector.load %arg3[%c0_4, %c0_5] : memref<128x128xbf16, #tpu.memory_space<vmem>>, vector<128x128xbf16>
    %cst = arith.constant dense<0.000000e+00> : vector<64x128xf32>
    %6 = tpu.matmul %4, %5, %cst {dimension_numbers = #tpu.dot_dimension_numbers<[1], [0], [0], [1], [0, 0, 1, 1], [], []>} : vector<64x128xbf16>, vector<128x128xbf16>, vector<64x128xf32> -> vector<64x128xf32>
    %7 = arith.addf %3, %6 : vector<64x128xf32>
    %c0_6 = arith.constant 0 : index
    %c0_7 = arith.constant 0 : index
    %8 = vector.load %arg5[%c0_6, %c0_7] : memref<64x128xf32, #tpu.memory_space<vmem>>, vector<64x128xf32>
    tpu.vector_store %arg5[%c0_6, %c0_7], %7 {strides = array<i32>} : memref<64x128xf32, #tpu.memory_space<vmem>>, vector<64x128xf32>,
    %c1_i32 = arith.constant 1 : i32
    %9 = arith.cmpi eq, %arg1, %c1_i32 : i32
    %10 = arith.extui %9 : i1 to i32
    %c0_i32_8 = arith.constant 0 : i32
    %11 = arith.cmpi ne, %10, %c0_i32_8 : i32
    scf.if %11 {
      %c0_9 = arith.constant 0 : index
      %c0_10 = arith.constant 0 : index
      %12 = vector.load %arg5[%c0_9, %c0_10] : memref<64x128xf32, #tpu.memory_space<vmem>>, vector<64x128xf32>
      %cst_11 = arith.constant 0.000000e+00 : f32
      %13 = vector.broadcast %cst_11 : f32 to vector<64x128xf32>
      %14 = arith.maximumf %12, %13 : vector<64x128xf32>
      %c0_12 = arith.constant 0 : index
      %c0_13 = arith.constant 0 : index
      %15 = vector.load %arg4[%c0_12, %c0_13] : memref<64x128xf32, #tpu.memory_space<vmem>>, vector<64x128xf32>
      tpu.vector_store %arg4[%c0_12, %c0_13], %14 {strides = array<i32>} : memref<64x128xf32, #tpu.memory_space<vmem>>, vector<64x128xf32>,
    } else {
    }
    return
  }
  func.func @transform_0(%arg0: i32, %arg1: i32) -> (i32, i32) {
    %c0_i32 = arith.constant 0 : i32
    return %arg0, %arg1 : i32, i32
  }
  func.func @transform_1(%arg0: i32, %arg1: i32) -> (i32, i32) {
    %c0_i32 = arith.constant 0 : i32
    %c0_i32_0 = arith.constant 0 : i32
    return %arg1, %c0_i32 : i32, i32
  }
  func.func @transform_2(%arg0: i32, %arg1: i32) -> (i32, i32) {
    %c0_i32 = arith.constant 0 : i32
    %c0_i32_0 = arith.constant 0 : i32
    return %arg0, %c0_i32 : i32, i32
  }
}

</mosaic_0001>

<llo_original>
// kernel: graph_conv_sparse.1
$region0: #{graph_conv_sparse.1}
  #allocation0 [shape = 'u32[]', space=smem, size = 0x4, offset = 0x4, fixed_abs, tag = 'smem constant byte address 0x4 - core index']
  #allocation1 [shape = 'u32[144,128]{1,0:T(1,128)}', space=vmem, size = 0x12000, scoped, tag = 'internal scratch']
  #allocation2 [shape = 'f32[64,128]{1,0:T(8,128)}', space=vmem, size = 0x8000, scoped, tag = 'scratch operand']
  %s0 = inlined_call_operand.vmem [shape: bf16[256,256], index: 0, kind: input, shape index: {}]
  %s1 = inlined_call_operand.vmem [shape: bf16[256,128], index: 1, kind: input, shape index: {}]
  %s2 = inlined_call_operand.vmem [shape: f32[256,128], index: 2, kind: output, shape index: {}]
  %s3 = sld [smem:[#allocation0]]
  $region90: #{graph_conv_sparse.1} parent=0
    _
  %s5 = ssub.s32 1, %s3
  %s6 = scalar_select 0, %s5, %s3
  $region1: #{graph_conv_sparse.1} parent=0
    #allocation3 [shape = 'u8[32768]{0}', space=vmem, size = 0x8000, scoped, tag = 'input window, operand 0']
    loop: start=0, step=1, limit=10
    $region2: #{graph_conv_sparse.1} parent=1 // loop_pre_header
      _
    $region3: #{graph_conv_sparse.1} parent=1 // loop_header
      %s8 = sphi 0, %s12
      %p9 = scmp.ge.s32.totalorder %s8, 10
      %s15 = sphi 0, %s27
      %s16 = sphi 0, %s23
      %s17 = sphi 0, %s15
      %s18 = sphi 0, %s16
      %s19 = sphi 0, %s17
      %s20 = sphi 0, %s18
      %s32 = sphi 0, %s34
      %s35 = sphi 0, %s32
      %s36 = sphi 0, %s35
      %s52 = sphi 0, %s36
      %s58 = sphi 0, %s60
      %s61 = sphi 0, %s58
      %s62 = sphi 0, %s61
      %s78 = sphi 0, %s62
      %s84 = sphi 0, %s86
      %s87 = sphi 0, %s84
      %s88 = sphi 0, %s87
      %s104 = sphi 0, %s88
    $region4: #{graph_conv_sparse.1} parent=1 // loop_header_branch
      %11 = sbr.rel (%p9) target = $region8
    $region5: #{graph_conv_sparse.1} parent=1 // loop_body
      %s13 = ssub.s32 %s8, 1
      %s14 = ssub.s32 %s8, 2
      %s21 = sadd.s32 1, %s16
      %p22 = scmp.ge.s32.totalorder %s21, 2
      %s23 = scalar_select %p22, 0, %s21
      %s24 = sadd.s32 1, %s15
      %s25 = scalar_select %p22, %s24, %s15
      %p26 = scmp.ge.s32.totalorder %s25, 4
      %s27 = scalar_select %p26, 0, %s25
      %s28 = ssub.s32 %s15, %s27
      %s29 = ssub.s32 %s16, %s23
      %s30 = sor.u32 %s28, %s29
      %p31 = scmp.eq.s32.totalorder %s30, 0
      %s33 = sadd.s32 %s32, 1
      %s34 = scalar_select %p31, %s32, %s33
      %p37 = pneg %p31
      %p38 = scmp.eq.s32.totalorder %s8, 7
      %p39 = por %p37, %p38
      %p40 = scmp.ne.s32.totalorder %s32, %s35
      %p41 = scmp.eq.s32.totalorder %s8, 0
      %p42 = por %p40, %p41
      %p43 = scmp.ne.s32.totalorder %s32, %s35
      %p44 = scmp.eq.s32.totalorder %s13, 7
      %p45 = por %p43, %p44
      %p46 = scmp.ne.s32.totalorder %s35, %s36
      %p47 = scmp.eq.s32.totalorder %s13, 0
      %p48 = por %p46, %p47
      %p49 = scmp.ne.s32.totalorder %s35, %s36
      %p50 = scmp.eq.s32.totalorder %s14, 7
      %p51 = por %p49, %p50
      %p53 = scmp.ne.s32.totalorder %s36, %s52
      %p54 = scmp.eq.s32.totalorder %s14, 0
      %p55 = por %p53, %p54
      %s56 = ssub.s32 %s16, %s23
      %p57 = scmp.eq.s32.totalorder %s56, 0
      %s59 = sadd.s32 %s58, 1
      %s60 = scalar_select %p57, %s58, %s59
      %p63 = pneg %p57
      %p64 = scmp.eq.s32.totalorder %s8, 7
      %p65 = por %p63, %p64
      %p66 = scmp.ne.s32.totalorder %s58, %s61
      %p67 = scmp.eq.s32.totalorder %s8, 0
      %p68 = por %p66, %p67
      %p69 = scmp.ne.s32.totalorder %s58, %s61
      %p70 = scmp.eq.s32.totalorder %s13, 7
      %p71 = por %p69, %p70
      %p72 = scmp.ne.s32.totalorder %s61, %s62
      %p73 = scmp.eq.s32.totalorder %s13, 0
      %p74 = por %p72, %p73
      %p75 = scmp.ne.s32.totalorder %s61, %s62
      %p76 = scmp.eq.s32.totalorder %s14, 7
      %p77 = por %p75, %p76
      %p79 = scmp.ne.s32.totalorder %s62, %s78
      %p80 = scmp.eq.s32.totalorder %s14, 0
      %p81 = por %p79, %p80
      %s82 = ssub.s32 %s15, %s27
      %p83 = scmp.eq.s32.totalorder %s82, 0
      %s85 = sadd.s32 %s84, 1
      %s86 = scalar_select %p83, %s84, %s85
      %p89 = pneg %p83
      %p90 = scmp.eq.s32.totalorder %s8, 7
      %p91 = por %p89, %p90
      %p92 = scmp.ne.s32.totalorder %s84, %s87
      %p93 = scmp.eq.s32.totalorder %s8, 0
      %p94 = por %p92, %p93
      %p95 = scmp.ne.s32.totalorder %s84, %s87
      %p96 = scmp.eq.s32.totalorder %s13, 7
      %p97 = por %p95, %p96
      %p98 = scmp.ne.s32.totalorder %s87, %s88
      %p99 = scmp.eq.s32.totalorder %s13, 0
      %p100 = por %p98, %p99
      %p101 = scmp.ne.s32.totalorder %s87, %s88
      %p102 = scmp.eq.s32.totalorder %s14, 7
      %p103 = por %p101, %p102
      %p105 = scmp.ne.s32.totalorder %s88, %s104
      %p106 = scmp.eq.s32.totalorder %s14, 0
      %p107 = por %p105, %p106
      %p108 = scmp.le.s32.totalorder 1, %s8
      %p109 = scmp.lt.s32.totalorder %s8, 9
      %p110 = pnand %p108, %p109
      %p111 = pneg %p110
      // Predicated region
      $region9: #{graph_conv_sparse.1} parent=5 // pred_check
        _
      $region10: #{graph_conv_sparse.1} parent=5 // pred_check_branch
        %113 = sbr.rel (%p110) target = $region12
      $region11: #{graph_conv_sparse.1} parent=5 // pred_region
        %s114 = ssub.s32 %s8, 1
      $region12: #{graph_conv_sparse.1} parent=5 // pred_fallthru
        _
      %p115 = scmp.lt.s32.totalorder %s8, 8
      // Predicated region
      $region13: #{graph_conv_sparse.1} parent=5 // pred_check
        %p116 = pneg %p115
      $region14: #{graph_conv_sparse.1} parent=5 // pred_check_branch
        %118 = sbr.rel (%p116) target = $region16
      $region15: #{graph_conv_sparse.1} parent=5 // pred_region
        // Predicated region
        $region17: #{graph_conv_sparse.1} parent=15 // pred_check
          %p119 = pneg %p42
        $region18: #{graph_conv_sparse.1} parent=15 // pred_check_branch
          %121 = sbr.rel (%p119) target = $region20
        $region19: #{graph_conv_sparse.1} parent=15 // pred_region
          %s122 = sand.u32 %s32, 1
          %s123 = sand.u32 %s32, 1
          %s124 = smul.addr %s123, 32
          %s125 = scalar_lea.vmem [#allocation3], %s124
          %s126 = smul.u32 8, %s15
          %s127 = smul.addr %s126, 2
          %s128 = sadd.s32 %s16, %s127
          %s129 = smul.addr %s128, 4
          %s130 = scalar_lea.vmem %s0, %s129
          // Predicated region
          $region21: #{graph_conv_sparse.1} parent=19 // pred_check
            _
          $region22: #{graph_conv_sparse.1} parent=19 // pred_check_branch
            %132 = sbr.rel (0) target = $region24
          $region23: #{graph_conv_sparse.1} parent=19 // pred_region
            // Predicated region
            $region25: #{graph_conv_sparse.1} parent=23 // pred_check
              _
            $region26: #{graph_conv_sparse.1} parent=23 // pred_check_branch
              %134 = sbr.rel target = $region28
            $region27: #{graph_conv_sparse.1} parent=23 // pred_region
              // Predicated region
              $region40: #{graph_conv_sparse.1} parent=27 // pred_check
                _
              $region41: #{graph_conv_sparse.1} parent=27 // pred_check_branch
                %163 = sbr.rel (0) target = $region43
              $region42: #{graph_conv_sparse.1} parent=27 // pred_region
                loop: start=0, step=1, limit=1
                $region44: #{graph_conv_sparse.1} parent=42 // loop_pre_header
                  _
                $region45: #{graph_conv_sparse.1} parent=42 // loop_header
                  %s165 = sphi 0, %s169
                  %p166 = scmp.ge.s32.totalorder %s165, 1
                  %s170 = sphi %s130, %s130
                  %s171 = sphi %s125, %s125
                $region46: #{graph_conv_sparse.1} parent=42 // loop_header_branch
                  %168 = sbr.rel (%p166) target = $region50
                $region47: #{graph_conv_sparse.1} parent=42 // loop_body
                  _
                $region48: #{graph_conv_sparse.1} parent=42 // loop_footer
                  %s169 = sadd.s32 1, %s165
                $region49: #{graph_conv_sparse.1} parent=42 // loop_footer_branch
                  %164 = sbr.rel target = $region45
                $region50: #{graph_conv_sparse.1} parent=42 // loop_exit
                  _
                loop: start=0, step=1, limit=1
                $region51: #{graph_conv_sparse.1} parent=42 // loop_pre_header
                  _
                $region52: #{graph_conv_sparse.1} parent=42 // loop_header
                  %s174 = sphi 0, %s178
                  %p175 = scmp.ge.s32.totalorder %s174, 1
                  %s179 = sphi %s130, %s130
                  %s180 = sphi %s125, %s125
                $region53: #{graph_conv_sparse.1} parent=42 // loop_header_branch
                  %177 = sbr.rel (%p175) target = $region57
                $region54: #{graph_conv_sparse.1} parent=42 // loop_body
                  %v181 = vld [vmem:[%s179] sm:$0xf]
                  %182 = vst [vmem:[%s180] sm:$0xf] %v181
                  %v183 = vld [vmem:[%s179 + $0x8] sm:$0xf]
                  %184 = vst [vmem:[%s180 + $0x4] sm:$0xf] %v183
                  %v185 = vld [vmem:[%s179 + $0x10] sm:$0xf]
                  %186 = vst [vmem:[%s180 + $0x8] sm:$0xf] %v185
                  %v187 = vld [vmem:[%s179 + $0x18] sm:$0xf]
                  %188 = vst [vmem:[%s180 + $0xc] sm:$0xf] %v187
                  %v189 = vld [vmem:[%s179 + $0x20] sm:$0xf]
                  %190 = vst [vmem:[%s180 + $0x10] sm:$0xf] %v189
                  %v191 = vld [vmem:[%s179 + $0x28] sm:$0xf]
                  %192 = vst [vmem:[%s180 + $0x14] sm:$0xf] %v191
                  %v193 = vld [vmem:[%s179 + $0x30] sm:$0xf]
                  %194 = vst [vmem:[%s180 + $0x18] sm:$0xf] %v193
                  %v195 = vld [vmem:[%s179 + $0x38] sm:$0xf]
                  %196 = vst [vmem:[%s180 + $0x1c] sm:$0xf] %v195
                $region55: #{graph_conv_sparse.1} parent=42 // loop_footer
                  %s178 = sadd.s32 1, %s174
                $region56: #{graph_conv_sparse.1} parent=42 // loop_footer_branch
                  %173 = sbr.rel target = $region52
                $region57: #{graph_conv_sparse.1} parent=42 // loop_exit
                  _
              $region43: #{graph_conv_sparse.1} parent=27 // pred_fallthru
                _
            $region28: #{graph_conv_sparse.1} parent=23 // pred_fallthru
              _
            // Predicated region
            $region29: #{graph_conv_sparse.1} parent=23 // pred_check
              _
            $region30: #{graph_conv_sparse.1} parent=23 // pred_check_branch
              %136 = sbr.rel (0) target = $region32
            $region31: #{graph_conv_sparse.1} parent=23 // pred_region
              loop: start=0, step=1, limit=1
              $region33: #{graph_conv_sparse.1} parent=31 // loop_pre_header
                _
              $region34: #{graph_conv_sparse.1} parent=31 // loop_header
                %s139 = sphi 0, %s143
                %p140 = scmp.ge.s32.totalorder %s139, 1
                %s144 = sphi %s130, %s130
                %s145 = sphi %s125, %s125
              $region35: #{graph_conv_sparse.1} parent=31 // loop_header_branch
                %142 = sbr.rel (%p140) target = $region39
              $region36: #{graph_conv_sparse.1} parent=31 // loop_body
                %v146 = vld [vmem:[%s144] sm:$0xf]
                %147 = vst [vmem:[%s145] sm:$0xf] %v146
                %v148 = vld [vmem:[%s144 + $0x8] sm:$0xf]
                %149 = vst [vmem:[%s145 + $0x4] sm:$0xf] %v148
                %v150 = vld [vmem:[%s144 + $0x10] sm:$0xf]
                %151 = vst [vmem:[%s145 + $0x8] sm:$0xf] %v150
                %v152 = vld [vmem:[%s144 + $0x18] sm:$0xf]
                %153 = vst [vmem:[%s145 + $0xc] sm:$0xf] %v152
                %v154 = vld [vmem:[%s144 + $0x20] sm:$0xf]
                %155 = vst [vmem:[%s145 + $0x10] sm:$0xf] %v154
                %v156 = vld [vmem:[%s144 + $0x28] sm:$0xf]
                %157 = vst [vmem:[%s145 + $0x14] sm:$0xf] %v156
                %v158 = vld [vmem:[%s144 + $0x30] sm:$0xf]
                %159 = vst [vmem:[%s145 + $0x18] sm:$0xf] %v158
                %v160 = vld [vmem:[%s144 + $0x38] sm:$0xf]
                %161 = vst [vmem:[%s145 + $0x1c] sm:$0xf] %v160
              $region37: #{graph_conv_sparse.1} parent=31 // loop_footer
                %s143 = sadd.s32 1, %s139
              $region38: #{graph_conv_sparse.1} parent=31 // loop_footer_branch
                %138 = sbr.rel target = $region34
              $region39: #{graph_conv_sparse.1} parent=31 // loop_exit
                _
            $region32: #{graph_conv_sparse.1} parent=23 // pred_fallthru
              _
          $region24: #{graph_conv_sparse.1} parent=19 // pred_fallthru
            _
          %197 = vnop
        $region20: #{graph_conv_sparse.1} parent=15 // pred_fallthru
          _
        // Predicated region
        $region58: #{graph_conv_sparse.1} parent=15 // pred_check
          %p198 = pneg %p68
        $region59: #{graph_conv_sparse.1} parent=15 // pred_check_branch
          %200 = sbr.rel (%p198) target = $region61
        $region60: #{graph_conv_sparse.1} parent=15 // pred_region
          %s201 = smul.u32 16, %s16
          %p202 = scmp.lt.s32.totalorder %s201, 31
          %s203 = scalar_select %p202, %s201, 31
          %s204 = smul.addr %s203, 4
          %s205 = scalar_lea.vmem %s1, %s204
          %s206 = smul.u32 16, %s16
        $region61: #{graph_conv_sparse.1} parent=15 // pred_fallthru
          _
      $region16: #{graph_conv_sparse.1} parent=5 // pred_fallthru
        _
      %p207 = scmp.le.s32.totalorder 1, %s8
      %p208 = scmp.lt.s32.totalorder %s8, 9
      %p209 = pnand %p207, %p208
      %p210 = pneg %p209
      // Predicated region
      $region62: #{graph_conv_sparse.1} parent=5 // pred_check
        _
      $region63: #{graph_conv_sparse.1} parent=5 // pred_check_branch
        %212 = sbr.rel (%p209) target = $region65
      $region64: #{graph_conv_sparse.1} parent=5 // pred_region
        %s213 = ssub.s32 %s8, 1
        %s214 = sand.u32 %s35, 1
        %s215 = sand.u32 %s35, 1
        %s216 = smul.addr %s215, 32
        %s217 = scalar_lea.vmem [#allocation3], %s216
        // Predicated region
        $region66: #{graph_conv_sparse.1} parent=64 // pred_check
          %p218 = pneg %p48
        $region67: #{graph_conv_sparse.1} parent=64 // pred_check_branch
          %220 = sbr.rel (%p218) target = $region69
        $region68: #{graph_conv_sparse.1} parent=64 // pred_region
          _
        $region69: #{graph_conv_sparse.1} parent=64 // pred_fallthru
          _
        %s221 = sand.u32 %s35, 1
        %s222 = sand.u32 %s35, 1
        %s223 = smul.addr %s222, 32
        %s224 = scalar_lea.vmem [#allocation3], %s223
        %p225 = pneg %p48
        %p226 = pneg %p45
        %s227 = smul.u32 16, %s18
        %p228 = scmp.lt.s32.totalorder %s227, 31
        %s229 = scalar_select %p228, %s227, 31
        %s230 = smul.addr %s229, 4
        %s231 = scalar_lea.vmem %s1, %s230
        %p232 = pneg %p74
        %p233 = pneg %p71
        %p234 = pneg %p100
        %p235 = pneg %p97
        %s236 = smul.u32 8, %s17
        %p237 = scmp.lt.s32.totalorder %s236, 31
        %s238 = scalar_select %p237, %s236, 31
        %s239 = smul.addr %s238, 8
        %s240 = scalar_lea.vmem %s2, %s239
        %s241 = smul.u32 8, %s17
        %s242 = smul.u32 16, %s18
        %p243 = scmp.lt.s32.totalorder %s242, 31
        %s244 = scalar_select %p243, %s242, 31
        %s245 = smul.addr %s244, 4
        %s246 = scalar_lea.vmem %s1, %s245
        %s247 = smul.u32 16, %s18
        %s248 = smul.u32 8, %s17
        %p249 = scmp.lt.s32.totalorder %s248, 31
        %s250 = scalar_select %p249, %s248, 31
        %s251 = smul.addr %s250, 8
        %s252 = scalar_lea.vmem %s2, %s251
        %s253 = smul.u32 8, %s17
        %p255 = scmp.eq.s32.totalorder %s18, 0
        // Predicated region
        $region70: #{graph_conv_sparse.1} parent=64 // pred_check
          %p256 = pneg %p255
        $region71: #{graph_conv_sparse.1} parent=64 // pred_check_branch
          %258 = sbr.rel (%p256) target = $region73
        $region72: #{graph_conv_sparse.1} parent=64 // pred_region
          %259 = vst [vmem:[#allocation2] sm:$0xff] 0.0
          %260 = vst [vmem:[#allocation2 + $0x8] sm:$0xff] 0.0
          %261 = vst [vmem:[#allocation2 + $0x10] sm:$0xff] 0.0
          %262 = vst [vmem:[#allocation2 + $0x18] sm:$0xff] 0.0
          %263 = vst [vmem:[#allocation2 + $0x20] sm:$0xff] 0.0
          %264 = vst [vmem:[#allocation2 + $0x28] sm:$0xff] 0.0
          %265 = vst [vmem:[#allocation2 + $0x30] sm:$0xff] 0.0
          %266 = vst [vmem:[#allocation2 + $0x38] sm:$0xff] 0.0
        $region73: #{graph_conv_sparse.1} parent=64 // pred_fallthru
          _
        %v267 = vld [vmem:[#allocation2] sm:$0xff]
        %v268 = vld [vmem:[#allocation2 + $0x8] sm:$0xff]
        %v269 = vld [vmem:[#allocation2 + $0x10] sm:$0xff]
        %v270 = vld [vmem:[#allocation2 + $0x18] sm:$0xff]
        %v271 = vld [vmem:[#allocation2 + $0x20] sm:$0xff]
        %v272 = vld [vmem:[#allocation2 + $0x28] sm:$0xff]
        %v273 = vld [vmem:[#allocation2 + $0x30] sm:$0xff]
        %v274 = vld [vmem:[#allocation2 + $0x38] sm:$0xff]
        %v275 = vld [vmem:[%s217] sm:$0xf]
        %v276 = vld [vmem:[%s217 + $0x4] sm:$0xf]
        %v277 = vld [vmem:[%s217 + $0x8] sm:$0xf]
        %v278 = vld [vmem:[%s217 + $0xc] sm:$0xf]
        %v279 = vld [vmem:[%s217 + $0x10] sm:$0xf]
        %v280 = vld [vmem:[%s217 + $0x14] sm:$0xf]
        %v281 = vld [vmem:[%s217 + $0x18] sm:$0xf]
        %v282 = vld [vmem:[%s217 + $0x1c] sm:$0xf]
        %v283 = vld [vmem:[%s246] sm:$0xf]
        %v284 = vld [vmem:[%s246 + $0x4] sm:$0xf]
        %v285 = vld [vmem:[%s246 + $0x8] sm:$0xf]
        %v286 = vld [vmem:[%s246 + $0xc] sm:$0xf]
        %v287 = vld [vmem:[%s246 + $0x10] sm:$0xf]
        %v288 = vld [vmem:[%s246 + $0x14] sm:$0xf]
        %v289 = vld [vmem:[%s246 + $0x18] sm:$0xf]
        %v290 = vld [vmem:[%s246 + $0x1c] sm:$0xf]
        %v291 = vld [vmem:[%s246 + $0x20] sm:$0xf]
        %v292 = vld [vmem:[%s246 + $0x24] sm:$0xf]
        %v293 = vld [vmem:[%s246 + $0x28] sm:$0xf]
        %v294 = vld [vmem:[%s246 + $0x2c] sm:$0xf]
        %v295 = vld [vmem:[%s246 + $0x30] sm:$0xf]
        %v296 = vld [vmem:[%s246 + $0x34] sm:$0xf]
        %v297 = vld [vmem:[%s246 + $0x38] sm:$0xf]
        %v298 = vld [vmem:[%s246 + $0x3c] sm:$0xf]
        %v307 = vunpack.c.l.b16 %v275
        %v308 = vunpack.c.l.b16 %v276
        %v309 = vunpack.c.l.b16 %v277
        %v310 = vunpack.c.l.b16 %v278
        %v311 = vunpack.c.l.b16 %v279
        %v312 = vunpack.c.l.b16 %v280
        %v313 = vunpack.c.l.b16 %v281
        %v314 = vunpack.c.l.b16 %v282
        %v315 = vpack.c.b16 %v308, %v307
        %v316 = vpack.c.b16 %v310, %v309
        %v317 = vpack.c.b16 %v312, %v311
        %v318 = vpack.c.b16 %v314, %v313
        %v339 = vunpack.c.l.b16 %v283
        %v340 = vunpack.c.l.b16 %v284
        %v341 = vunpack.c.l.b16 %v285
        %v342 = vunpack.c.l.b16 %v286
        %v343 = vunpack.c.l.b16 %v287
        %v344 = vunpack.c.l.b16 %v288
        %v345 = vunpack.c.l.b16 %v289
        %v346 = vunpack.c.l.b16 %v290
        %v347 = vunpack.c.l.b16 %v291
        %v348 = vunpack.c.l.b16 %v292
        %v349 = vunpack.c.l.b16 %v293
        %v350 = vunpack.c.l.b16 %v294
        %v351 = vunpack.c.l.b16 %v295
        %v352 = vunpack.c.l.b16 %v296
        %v353 = vunpack.c.l.b16 %v297
        %v354 = vunpack.c.l.b16 %v298
        %v355 = vpack.c.b16 %v340, %v339
        %v356 = vpack.c.b16 %v342, %v341
        %v357 = vpack.c.b16 %v344, %v343
        %v358 = vpack.c.b16 %v346, %v345
        %v359 = vpack.c.b16 %v348, %v347
        %v360 = vpack.c.b16 %v350, %v349
        %v361 = vpack.c.b16 %v352, %v351
        %v362 = vpack.c.b16 %v354, %v353
        %371 = vmatprep.subr.bf16.mxu0 0
        %372 = vmatpush1.bf16.msra.mxu0 %v355
        %373 = vmatprep.subr.bf16.mxu0 0
        %374 = vmatpush1.bf16.msra.mxu0 %v356
        %375 = vmatprep.subr.bf16.mxu0 0
        %376 = vmatpush1.bf16.msra.mxu0 %v357
        %377 = vmatprep.subr.bf16.mxu0 0
        %378 = vmatpush1.bf16.msra.mxu0 %v358
        %379 = vmatprep.subr.bf16.mxu0 0
        %380 = vmatpush1.bf16.msra.mxu0 %v359
        %381 = vmatprep.subr.bf16.mxu0 0
        %382 = vmatpush1.bf16.msra.mxu0 %v360
        %383 = vmatprep.subr.bf16.mxu0 0
        %384 = vmatpush1.bf16.msra.mxu0 %v361
        %385 = vmatprep.subr.bf16.mxu0 0
        %386 = vmatpush1.bf16.msra.mxu0 %v362
        %387 = vmatprep.subr.bf16.mxu0 0
        %388 = vmatpush1.bf16.msra.mxu0 0
        %389 = vmatprep.subr.bf16.mxu0 0
        %390 = vmatpush1.bf16.msra.mxu0 0
        %391 = vmatprep.subr.bf16.mxu0 0
        %392 = vmatpush1.bf16.msra.mxu0 0
        %393 = vmatprep.subr.bf16.mxu0 0
        %394 = vmatpush1.bf16.msra.mxu0 0
        %395 = vmatprep.subr.bf16.mxu0 0
        %396 = vmatpush1.bf16.msra.mxu0 0
        %397 = vmatprep.subr.bf16.mxu0 0
        %398 = vmatpush1.bf16.msra.mxu0 0
        %399 = vmatprep.subr.bf16.mxu0 0
        %400 = vmatpush1.bf16.msra.mxu0 0
        %401 = vmatprep.subr.bf16.mxu0 0
        %402 = vmatpush1.bf16.msra.mxu0 0
        %403 = vmatprep.mubr.bf16.mxu0 0
        %404 = vmatmul.mubr.bf16.gmra.mrb[0].mxu0 %v315
        %v405 = vpop.f32.mrb[0].mxu0
        %v406 = vadd.f32 0.0, %v405
        %v407 = vpop.f32.mrb[0].mxu0
        %v408 = vpop.f32.mrb[0].mxu0
        %v409 = vadd.f32 0.0, %v408
        %v410 = vpop.f32.mrb[0].mxu0
        %411 = vmatprep.mubr.bf16.mxu0 0
        %412 = vmatmul.mubr.bf16.gmra.mrb[0].mxu0 %v316
        %v413 = vpop.f32.mrb[0].mxu0
        %v414 = vadd.f32 0.0, %v413
        %v415 = vpop.f32.mrb[0].mxu0
        %v416 = vpop.f32.mrb[0].mxu0
        %v417 = vadd.f32 0.0, %v416
        %v418 = vpop.f32.mrb[0].mxu0
        %419 = vmatprep.mubr.bf16.mxu0 0
        %420 = vmatmul.mubr.bf16.gmra.mrb[0].mxu0 %v317
        %v421 = vpop.f32.mrb[0].mxu0
        %v422 = vadd.f32 0.0, %v421
        %v423 = vpop.f32.mrb[0].mxu0
        %v424 = vpop.f32.mrb[0].mxu0
        %v425 = vadd.f32 0.0, %v424
        %v426 = vpop.f32.mrb[0].mxu0
        %427 = vmatprep.mubr.bf16.mxu0 0
        %428 = vmatmul.mubr.bf16.gmra.mrb[0].mxu0 %v318
        %v429 = vpop.f32.mrb[0].mxu0
        %v430 = vadd.f32 0.0, %v429
        %v431 = vpop.f32.mrb[0].mxu0
        %v432 = vpop.f32.mrb[0].mxu0
        %v433 = vadd.f32 0.0, %v432
        %v434 = vpop.f32.mrb[0].mxu0
        %435 = vdwg.mxu0
        %v436 = vadd.f32 %v267, %v406
        %v437 = vadd.f32 %v268, %v409
        %v438 = vadd.f32 %v269, %v414
        %v439 = vadd.f32 %v270, %v417
        %v440 = vadd.f32 %v271, %v422
        %v441 = vadd.f32 %v272, %v425
        %v442 = vadd.f32 %v273, %v430
        %v443 = vadd.f32 %v274, %v433
        %444 = vst [vmem:[#allocation2] sm:$0xff] %v436
        %445 = vst [vmem:[#allocation2 + $0x8] sm:$0xff] %v437
        %446 = vst [vmem:[#allocation2 + $0x10] sm:$0xff] %v438
        %447 = vst [vmem:[#allocation2 + $0x18] sm:$0xff] %v439
        %448 = vst [vmem:[#allocation2 + $0x20] sm:$0xff] %v440
        %449 = vst [vmem:[#allocation2 + $0x28] sm:$0xff] %v441
        %450 = vst [vmem:[#allocation2 + $0x30] sm:$0xff] %v442
        %451 = vst [vmem:[#allocation2 + $0x38] sm:$0xff] %v443
        %p452 = scmp.eq.s32.totalorder %s18, 1
        // Predicated region
        $region74: #{graph_conv_sparse.1} parent=64 // pred_check
          %p453 = pneg %p452
        $region75: #{graph_conv_sparse.1} parent=64 // pred_check_branch
          %455 = sbr.rel (%p453) target = $region77
        $region76: #{graph_conv_sparse.1} parent=64 // pred_region
          %v456 = vld [vmem:[#allocation2] sm:$0xff]
          %v457 = vld [vmem:[#allocation2 + $0x8] sm:$0xff]
          %v458 = vld [vmem:[#allocation2 + $0x10] sm:$0xff]
          %v459 = vld [vmem:[#allocation2 + $0x18] sm:$0xff]
          %v460 = vld [vmem:[#allocation2 + $0x20] sm:$0xff]
          %v461 = vld [vmem:[#allocation2 + $0x28] sm:$0xff]
          %v462 = vld [vmem:[#allocation2 + $0x30] sm:$0xff]
          %v463 = vld [vmem:[#allocation2 + $0x38] sm:$0xff]
          %v464 = vmax.f32 %v456, 0.0
          %v465 = vmax.f32 %v457, 0.0
          %v466 = vmax.f32 %v458, 0.0
          %v467 = vmax.f32 %v459, 0.0
          %v468 = vmax.f32 %v460, 0.0
          %v469 = vmax.f32 %v461, 0.0
          %v470 = vmax.f32 %v462, 0.0
          %v471 = vmax.f32 %v463, 0.0
          %472 = vst [vmem:[%s252] sm:$0xff] %v464
          %473 = vst [vmem:[%s252 + $0x8] sm:$0xff] %v465
          %474 = vst [vmem:[%s252 + $0x10] sm:$0xff] %v466
          %475 = vst [vmem:[%s252 + $0x18] sm:$0xff] %v467
          %476 = vst [vmem:[%s252 + $0x20] sm:$0xff] %v468
          %477 = vst [vmem:[%s252 + $0x28] sm:$0xff] %v469
          %478 = vst [vmem:[%s252 + $0x30] sm:$0xff] %v470
          %479 = vst [vmem:[%s252 + $0x38] sm:$0xff] %v471
        $region77: #{graph_conv_sparse.1} parent=64 // pred_fallthru
          _
        %s480 = smul.u32 8, %s17
        %p481 = scmp.lt.s32.totalorder %s480, 31
        %s482 = scalar_select %p481, %s480, 31
        %s483 = smul.addr %s482, 8
        %s484 = scalar_lea.vmem %s2, %s483
        // Predicated region
        $region78: #{graph_conv_sparse.1} parent=64 // pred_check
          %p485 = pneg %p97
        $region79: #{graph_conv_sparse.1} parent=64 // pred_check_branch
          %487 = sbr.rel (%p485) target = $region81
        $region80: #{graph_conv_sparse.1} parent=64 // pred_region
          %s488 = smul.u32 8, %s17
        $region81: #{graph_conv_sparse.1} parent=64 // pred_fallthru
          _
      $region65: #{graph_conv_sparse.1} parent=5 // pred_fallthru
        _
      %p489 = scmp.le.s32.totalorder 2, %s8
      // Predicated region
      $region82: #{graph_conv_sparse.1} parent=5 // pred_check
        %p490 = pneg %p489
      $region83: #{graph_conv_sparse.1} parent=5 // pred_check_branch
        %492 = sbr.rel (%p490) target = $region85
      $region84: #{graph_conv_sparse.1} parent=5 // pred_region
        %s493 = ssub.s32 %s8, 2
        // Predicated region
        $region86: #{graph_conv_sparse.1} parent=84 // pred_check
          %p494 = pneg %p103
        $region87: #{graph_conv_sparse.1} parent=84 // pred_check_branch
          %496 = sbr.rel (%p494) target = $region89
        $region88: #{graph_conv_sparse.1} parent=84 // pred_region
          %s497 = smul.u32 8, %s19
          %p498 = scmp.lt.s32.totalorder %s497, 31
          %s499 = scalar_select %p498, %s497, 31
          %s500 = smul.addr %s499, 8
          %s501 = scalar_lea.vmem %s2, %s500
        $region89: #{graph_conv_sparse.1} parent=84 // pred_fallthru
          _
      $region85: #{graph_conv_sparse.1} parent=5 // pred_fallthru
        _
    $region6: #{graph_conv_sparse.1} parent=1 // loop_footer
      %s12 = sadd.s32 1, %s8
    $region7: #{graph_conv_sparse.1} parent=1 // loop_footer_branch
      %7 = sbr.rel target = $region3
    $region8: #{graph_conv_sparse.1} parent=1 // loop_exit
      _

</llo_original>
